<compile_context>
chip_gen: v7x
topology: tpu7x:2x2x1
jax: 0.10.0
libtpu: 0.0.40
codegen_flags: <defaults>
</compile_context>

<pallas_src>
import functools

import jax
import jax.numpy as jnp
from jax.experimental import pallas as pl
from jax.experimental.pallas import tpu as pltpu


def _fused_conv_bn_relu_kernel(w_ref, xcol_ref, gamma_ref, beta_ref, out_ref,
                               *, use_bn, eps):
    # w_ref:     (Cout, K*K*Cin)     bf16 flattened weights, (kh, kw, cin) order
    # xcol_ref:  (K*K*Cin, N*Ho*Wo)  bf16 im2col operand, lane-dense minor dim
    # gamma_ref: (Cout, 1)           f32
    # beta_ref:  (Cout, 1)           f32
    # out_ref:   (N, Cout, Ho*Wo)    f32, NCHW up to a free reshape
    n_batch, _, hw = out_ref.shape

    # Whole-batch dilated conv as ONE deep MXU matmul: bf16 operands, f32 acc.
    acc = jnp.dot(w_ref[...], xcol_ref[...],
                  preferred_element_type=jnp.float32)          # (Cout, N*Ho*Wo)

    if use_bn:
        # Training-mode BatchNorm2d: per-channel stats over (N, Ho, Wo), biased
        # variance, centered formulation, all in f32.
        cnt = float(n_batch * hw)
        mean = jnp.sum(acc, axis=1, keepdims=True) / cnt        # (Cout, 1)
        c = acc - mean
        var = jnp.sum(c * c, axis=1, keepdims=True) / cnt       # (Cout, 1)
        scale = gamma_ref[...] * jax.lax.rsqrt(var + eps)       # (Cout, 1)
        y = c * scale + beta_ref[...]
    else:
        y = acc

    y = jnp.maximum(y, 0.0)

    # Per-batch slices along the lane dim (Ho*Wo = 256, multiple of 128 ->
    # lane-aligned, unmasked stores) -> NCHW-flat output, no wrapper transpose.
    for n in range(n_batch):
        out_ref[n] = y[:, n * hw:(n + 1) * hw]


def assp_dilation_branch(x_nchw, weight_oihw, gamma, beta, *,
                         dilation, use_bn=True, eps=1e-5):
    """Forward pass of AsspDilationBranch. NCHW input/output, OIHW weight (PyTorch)."""
    N, Cin, H, W = x_nchw.shape
    Cout, _, K, _ = weight_oihw.shape
    pad = 0 if K == 1 else dilation
    Ho = H + 2 * pad - dilation * (K - 1)
    Wo = W + 2 * pad - dilation * (K - 1)
    HoWo = Ho * Wo
    KKCin = K * K * Cin

    # Zero pad H/W (tiny here; fold into the kernel index math at scale).
    xp = jnp.pad(x_nchw.astype(jnp.float32),
                 ((0, 0), (0, 0), (pad, pad), (pad, pad)))

    # im2col operand: rows ordered (kh, kw, cin), columns ordered (n, ho, wo).
    # Built in the wrapper because Cin=4 << 128 would otherwise force
    # lane-sparse masked stores inside the kernel.  bf16 operand, 36 KB.
    taps = []
    for kh in range(K):
        for kw in range(K):
            sl = xp[:, :, kh * dilation:kh * dilation + Ho,
                    kw * dilation:kw * dilation + Wo]            # (N, Cin, Ho, Wo)
            taps.append(jnp.transpose(sl, (1, 0, 2, 3)).reshape(Cin, N * HoWo))
    xcol_t = jnp.concatenate(taps, axis=0).astype(jnp.bfloat16)  # (K*K*Cin, N*Ho*Wo)

    # Flattened weights (Cout, K*K*Cin) matching the (kh, kw, cin) row order.
    w_flat = jnp.transpose(weight_oihw.astype(jnp.float32),
                           (0, 2, 3, 1)).reshape(Cout, KKCin).astype(jnp.bfloat16)
    g = gamma.astype(jnp.float32).reshape(Cout, 1)
    b = beta.astype(jnp.float32).reshape(Cout, 1)

    out_flat = pl.pallas_call(
        functools.partial(_fused_conv_bn_relu_kernel, use_bn=use_bn, eps=eps),
        grid=(1,),
        in_specs=[
            pl.BlockSpec((Cout, KKCin), lambda i: (0, 0)),
            pl.BlockSpec((KKCin, N * HoWo), lambda i: (0, 0)),
            pl.BlockSpec((Cout, 1), lambda i: (0, 0)),
            pl.BlockSpec((Cout, 1), lambda i: (0, 0)),
        ],
        out_specs=pl.BlockSpec((N, Cout, HoWo), lambda i: (0, 0, 0)),
        out_shape=jax.ShapeDtypeStruct((N, Cout, HoWo), jnp.float32),
        compiler_params=pltpu.CompilerParams(
            dimension_semantics=("arbitrary",)),
    )(w_flat, xcol_t, g, b)

    # (N, Cout, Ho*Wo) -> (N, Cout, Ho, Wo): pure reshape, already NCHW.
    return out_flat.reshape(N, Cout, Ho, Wo)


def _reference(x_nchw, weight_oihw, gamma, beta, *, dilation, use_bn=True,
               eps=1e-5, cast_operands_to_bf16=False):
    """Pure-JAX reference mirroring the PyTorch module (training-mode BN)."""
    K = weight_oihw.shape[2]
    pad = 0 if K == 1 else dilation
    x = x_nchw.astype(jnp.float32)
    w = weight_oihw.astype(jnp.float32)
    if cast_operands_to_bf16:
        x = x.astype(jnp.bfloat16).astype(jnp.float32)
        w = w.astype(jnp.bfloat16).astype(jnp.float32)
    y = jax.lax.conv_general_dilated(
        x, w, window_strides=(1, 1),
        padding=[(pad, pad), (pad, pad)], rhs_dilation=(dilation, dilation),
        dimension_numbers=("NCHW", "OIHW", "NCHW"))
    if use_bn:
        mean = jnp.mean(y, axis=(0, 2, 3), keepdims=True)
        var = jnp.var(y, axis=(0, 2, 3), keepdims=True)
        y = (y - mean) / jnp.sqrt(var + eps) * gamma.reshape(1, -1, 1, 1) \
            + beta.reshape(1, -1, 1, 1)
    return jnp.maximum(y, 0.0)


if __name__ == "__main__":
    # Module config: in_channels=4, out_channels=8, kernel_size=3, dilation=2
    N, Cin, Cout, H, W = 2, 4, 8, 16, 16
    K, dilation = 3, 2

    key = jax.random.PRNGKey(0)
    kx, kw, kg, kb = jax.random.split(key, 4)
    x = jax.random.normal(kx, (N, Cin, H, W), jnp.float32)                  # NCHW input
    weight = 0.1 * jax.random.normal(kw, (Cout, Cin, K, K), jnp.float32)    # OIHW (PyTorch)
    gamma = 1.0 + 0.1 * jax.random.normal(kg, (Cout,), jnp.float32)
    beta = 0.05 * jax.random.normal(kb, (Cout,), jnp.float32)

    out = assp_dilation_branch(x, weight, gamma, beta, dilation=dilation, use_bn=True)
    out = jax.block_until_ready(out)
    assert out.shape == (N, Cout, H, W)

    # Tight check vs a reference with matching bf16-operand rounding (f32 accumulate).
    ref_bf16 = _reference(x, weight, gamma, beta, dilation=dilation, use_bn=True,
                          cast_operands_to_bf16=True)
    err_b = jnp.max(jnp.abs(out - ref_bf16))
    assert jnp.allclose(out, ref_bf16, atol=1e-3, rtol=1e-3), f"bf16-ref max err {err_b}"

    # Loose check vs the exact f32 PyTorch-semantics reference (bf16 operand rounding).
    ref_f32 = _reference(x, weight, gamma, beta, dilation=dilation, use_bn=True,
                         cast_operands_to_bf16=False)
    err_f = jnp.max(jnp.abs(out - ref_f32))
    assert jnp.allclose(out, ref_f32, atol=3e-2, rtol=3e-2), f"f32-ref max err {err_f}"

    print("KERNEL_OK")
</pallas_src>

<mosaic_0001>
module attributes {stable_mosaic.version = 11 : i64} {
  func.func @_fused_conv_bn_relu_kernel(%arg0: i32, %arg1: memref<8x36xbf16, #tpu.memory_space<vmem>>, %arg2: memref<36x512xbf16, #tpu.memory_space<vmem>>, %arg3: memref<8x1xf32, #tpu.memory_space<vmem>>, %arg4: memref<8x1xf32, #tpu.memory_space<vmem>>, %arg5: memref<2x8x256xf32, #tpu.memory_space<vmem>>) attributes {dimension_semantics = [#tpu.dimension_semantics<arbitrary>], iteration_bounds = array<i64: 1>, scalar_prefetch = 0 : i64, scratch_operands = 0 : i64, tpu.core_type = #tpu.core_type<tc>, window_params = [{pipeline_mode = #tpu.pipeline_mode<synchronous>, transform_indices = @transform_0, window_bounds = array<i64: 8, 36>}, {pipeline_mode = #tpu.pipeline_mode<synchronous>, transform_indices = @transform_1, window_bounds = array<i64: 36, 512>}, {pipeline_mode = #tpu.pipeline_mode<synchronous>, transform_indices = @transform_2, window_bounds = array<i64: 8, 1>}, {pipeline_mode = #tpu.pipeline_mode<synchronous>, transform_indices = @transform_3, window_bounds = array<i64: 8, 1>}, {pipeline_mode = #tpu.pipeline_mode<synchronous>, transform_indices = @transform_4, window_bounds = array<i64: 2, 8, 256>}]} {
    %c0 = arith.constant 0 : index
    %c0_0 = arith.constant 0 : index
    %0 = vector.load %arg1[%c0, %c0_0] : memref<8x36xbf16, #tpu.memory_space<vmem>>, vector<8x36xbf16>
    %c0_1 = arith.constant 0 : index
    %c0_2 = arith.constant 0 : index
    %1 = vector.load %arg2[%c0_1, %c0_2] : memref<36x512xbf16, #tpu.memory_space<vmem>>, vector<36x512xbf16>
    %cst = arith.constant dense<0.000000e+00> : vector<8x512xf32>
    %2 = tpu.matmul %0, %1, %cst {dimension_numbers = #tpu.dot_dimension_numbers<[1], [0], [0], [1], [0, 0, 1, 1], [], []>} : vector<8x36xbf16>, vector<36x512xbf16>, vector<8x512xf32> -> vector<8x512xf32>
    %cst_3 = arith.constant dense<0.000000e+00> : vector<8xf32>
    %3 = vector.multi_reduction <add>, %2, %cst_3 [1] : vector<8x512xf32> to vector<8xf32>
    %4 = vector.shape_cast %3 : vector<8xf32> to vector<8x1xf32>
    %cst_4 = arith.constant 5.120000e+02 : f32
    %5 = vector.broadcast %cst_4 : f32 to vector<8x1xf32>
    %6 = arith.divf %4, %5 : vector<8x1xf32>
    %7 = vector.broadcast %6 : vector<8x1xf32> to vector<8x512xf32>
    %8 = arith.subf %2, %7 : vector<8x512xf32>
    %9 = arith.mulf %8, %8 : vector<8x512xf32>
    %cst_5 = arith.constant dense<0.000000e+00> : vector<8xf32>
    %10 = vector.multi_reduction <add>, %9, %cst_5 [1] : vector<8x512xf32> to vector<8xf32>
    %11 = vector.shape_cast %10 : vector<8xf32> to vector<8x1xf32>
    %cst_6 = arith.constant 5.120000e+02 : f32
    %12 = vector.broadcast %cst_6 : f32 to vector<8x1xf32>
    %13 = arith.divf %11, %12 : vector<8x1xf32>
    %c0_7 = arith.constant 0 : index
    %c0_8 = arith.constant 0 : index
    %14 = vector.load %arg3[%c0_7, %c0_8] : memref<8x1xf32, #tpu.memory_space<vmem>>, vector<8x1xf32>
    %cst_9 = arith.constant 9.99999974E-6 : f32
    %15 = vector.broadcast %cst_9 : f32 to vector<8x1xf32>
    %16 = arith.addf %13, %15 : vector<8x1xf32>
    %17 = math.rsqrt %16 : vector<8x1xf32>
    %18 = arith.mulf %14, %17 : vector<8x1xf32>
    %19 = vector.broadcast %18 : vector<8x1xf32> to vector<8x512xf32>
    %20 = arith.mulf %8, %19 : vector<8x512xf32>
    %c0_10 = arith.constant 0 : index
    %c0_11 = arith.constant 0 : index
    %21 = vector.load %arg4[%c0_10, %c0_11] : memref<8x1xf32, #tpu.memory_space<vmem>>, vector<8x1xf32>
    %22 = vector.broadcast %21 : vector<8x1xf32> to vector<8x512xf32>
    %23 = arith.addf %20, %22 : vector<8x512xf32>
    %cst_12 = arith.constant 0.000000e+00 : f32
    %24 = vector.broadcast %cst_12 : f32 to vector<8x512xf32>
    %25 = arith.maximumf %23, %24 : vector<8x512xf32>
    %26 = vector.extract_strided_slice %25 {offsets = [0, 0], sizes = [8, 256], strides = [1, 1]} : vector<8x512xf32> to vector<8x256xf32>
    %c0_13 = arith.constant 0 : index
    %c0_14 = arith.constant 0 : index
    %c0_15 = arith.constant 0 : index
    %27 = vector.load %arg5[%c0_13, %c0_14, %c0_15] : memref<2x8x256xf32, #tpu.memory_space<vmem>>, vector<1x8x256xf32>
    %28 = vector.shape_cast %27 : vector<1x8x256xf32> to vector<8x256xf32>
    %29 = vector.shape_cast %26 : vector<8x256xf32> to vector<1x8x256xf32>
    tpu.vector_store %arg5[%c0_13, %c0_14, %c0_15], %29 {strides = array<i32>} : memref<2x8x256xf32, #tpu.memory_space<vmem>>, vector<1x8x256xf32>,
    %30 = vector.extract_strided_slice %25 {offsets = [0, 256], sizes = [8, 256], strides = [1, 1]} : vector<8x512xf32> to vector<8x256xf32>
    %c1 = arith.constant 1 : index
    %c0_16 = arith.constant 0 : index
    %c0_17 = arith.constant 0 : index
    %31 = vector.load %arg5[%c1, %c0_16, %c0_17] : memref<2x8x256xf32, #tpu.memory_space<vmem>>, vector<1x8x256xf32>
    %32 = vector.shape_cast %31 : vector<1x8x256xf32> to vector<8x256xf32>
    %33 = vector.shape_cast %30 : vector<8x256xf32> to vector<1x8x256xf32>
    tpu.vector_store %arg5[%c1, %c0_16, %c0_17], %33 {strides = array<i32>} : memref<2x8x256xf32, #tpu.memory_space<vmem>>, vector<1x8x256xf32>,
    return
  }
  func.func @transform_0(%arg0: i32) -> (i32, i32) {
    %c0_i32 = arith.constant 0 : i32
    %c0_i32_0 = arith.constant 0 : i32
    %c0_i32_1 = arith.constant 0 : i32
    return %c0_i32, %c0_i32_0 : i32, i32
  }
  func.func @transform_1(%arg0: i32) -> (i32, i32) {
    %c0_i32 = arith.constant 0 : i32
    %c0_i32_0 = arith.constant 0 : i32
    %c0_i32_1 = arith.constant 0 : i32
    return %c0_i32, %c0_i32_0 : i32, i32
  }
  func.func @transform_2(%arg0: i32) -> (i32, i32) {
    %c0_i32 = arith.constant 0 : i32
    %c0_i32_0 = arith.constant 0 : i32
    %c0_i32_1 = arith.constant 0 : i32
    return %c0_i32, %c0_i32_0 : i32, i32
  }
  func.func @transform_3(%arg0: i32) -> (i32, i32) {
    %c0_i32 = arith.constant 0 : i32
    %c0_i32_0 = arith.constant 0 : i32
    %c0_i32_1 = arith.constant 0 : i32
    return %c0_i32, %c0_i32_0 : i32, i32
  }
  func.func @transform_4(%arg0: i32) -> (i32, i32, i32) {
    %c0_i32 = arith.constant 0 : i32
    %c0_i32_0 = arith.constant 0 : i32
    %c0_i32_1 = arith.constant 0 : i32
    %c0_i32_2 = arith.constant 0 : i32
    return %c0_i32, %c0_i32_0, %c0_i32_1 : i32, i32, i32
  }
}

</mosaic_0001>

<llo_original>
// kernel: tpu_custom_call.1
$region0: #{tpu_custom_call.1}
  #allocation0 [shape = 'u32[]', space=smem, size = 0x4, offset = 0x4, fixed_abs, tag = 'smem constant byte address 0x4 - core index']
  #allocation1 [shape = 'u32[144,128]{1,0:T(1,128)}', space=vmem, size = 0x12000, scoped, tag = 'internal scratch']
  %s0 = inlined_call_operand.vmem [shape: bf16[8,36], index: 0, kind: input, shape index: {}]
  %s1 = inlined_call_operand.hbm [shape: bf16[36,512], index: 1, kind: input, shape index: {}]
  %s2 = inlined_call_operand.vmem [shape: f32[8,1], index: 2, kind: input, shape index: {}]
  %s3 = inlined_call_operand.vmem [shape: f32[8,1], index: 3, kind: input, shape index: {}]
  %s4 = inlined_call_operand.hbm [shape: f32[2,8,256], index: 4, kind: output, shape index: {}]
  %s5 = sld [smem:[#allocation0]]
  $region30: #{tpu_custom_call.1} parent=0
    _
  %s7 = ssub.s32 1, %s5
  %s8 = scalar_select 0, %s7, %s5
  $region1: #{tpu_custom_call.1} parent=0
    #allocation2 [shape = 'u8[40960]{0}', space=vmem, size = 0xa000, scoped, tag = 'input window, operand 1, single buffered']
    #allocation3 [shape = 's32[1]{0}', space=sflag, size = 0x4, scoped, tag = 'scoped memory for tpu_custom_call.1']
    #allocation4 [shape = 's32[1]{0}', space=sflag, size = 0x4, scoped, tag = 'scoped memory for tpu_custom_call.1']
    #allocation5 [shape = 'u8[16384]{0}', space=vmem, size = 0x4000, scoped, tag = 'output window, operand 0, single buffered']
    %9 = vsyncpa [#allocation3], 0
    %10 = vsyncpa [#allocation4], 0
    // Predicated region
    $region2: #{tpu_custom_call.1} parent=1 // pred_check
      _
    $region3: #{tpu_custom_call.1} parent=1 // pred_check_branch
      %12 = sbr.rel (0) target = $region5
    $region4: #{tpu_custom_call.1} parent=1 // pred_region
      _
    $region5: #{tpu_custom_call.1} parent=1 // pred_fallthru
      _
    // Predicated region
    $region6: #{tpu_custom_call.1} parent=1 // pred_check
      _
    $region7: #{tpu_custom_call.1} parent=1 // pred_check_branch
      %14 = sbr.rel (0) target = $region9
    $region8: #{tpu_custom_call.1} parent=1 // pred_region
      %s16 = ssub.s32 1280, 1280
      %17 = vsyncadd [#allocation3], %s16
      %s18 = sshll.u32 [#allocation2], 4
      %s19 = int_to_ptr.vmem [resolvable:$true] %s18
      %24 = dma.hbm_to_vmem [thread:$0]  %s1, 1280, %s19, [#allocation3], 256, 256, 16
    $region9: #{tpu_custom_call.1} parent=1 // pred_fallthru
      _
    // Predicated region
    $region10: #{tpu_custom_call.1} parent=1 // pred_check
      _
    $region11: #{tpu_custom_call.1} parent=1 // pred_check_branch
      %26 = sbr.rel (0) target = $region13
    $region12: #{tpu_custom_call.1} parent=1 // pred_region
      _
    $region13: #{tpu_custom_call.1} parent=1 // pred_fallthru
      _
    // Predicated region
    $region14: #{tpu_custom_call.1} parent=1 // pred_check
      _
    $region15: #{tpu_custom_call.1} parent=1 // pred_check_branch
      %28 = sbr.rel (0) target = $region17
    $region16: #{tpu_custom_call.1} parent=1 // pred_region
      _
    $region17: #{tpu_custom_call.1} parent=1 // pred_fallthru
      _
    // Predicated region
    $region18: #{tpu_custom_call.1} parent=1 // pred_check
      _
    $region19: #{tpu_custom_call.1} parent=1 // pred_check_branch
      %30 = sbr.rel (0) target = $region21
    $region20: #{tpu_custom_call.1} parent=1 // pred_region
      %31 = dma.done [#allocation3], 1280
    $region21: #{tpu_custom_call.1} parent=1 // pred_fallthru
      _
    %v33 = vld [vmem:[%s0] sm:$0xf]
    %v34 = vld [vmem:[#allocation2] sm:$0xff]
    %v35 = vld [vmem:[#allocation2 + $0x8] sm:$0xff]
    %v36 = vld [vmem:[#allocation2 + $0x10] sm:$0xff]
    %v37 = vld [vmem:[#allocation2 + $0x18] sm:$0xff]
    %v38 = vld [vmem:[#allocation2 + $0x20] sm:$0xff]
    %v39 = vld [vmem:[#allocation2 + $0x28] sm:$0xff]
    %v40 = vld [vmem:[#allocation2 + $0x30] sm:$0xff]
    %v41 = vld [vmem:[#allocation2 + $0x38] sm:$0xff]
    %v42 = vld [vmem:[#allocation2 + $0x40] sm:$0x33]
    %v43 = vld [vmem:[#allocation2 + $0x48] sm:$0x33]
    %v54 = vunpack.c.l.b16 %v34
    %v55 = vunpack.c.h.b16 %v34
    %v56 = vunpack.c.l.b16 %v35
    %v57 = vunpack.c.h.b16 %v35
    %v58 = vunpack.c.l.b16 %v36
    %v59 = vunpack.c.h.b16 %v36
    %v60 = vunpack.c.l.b16 %v37
    %v61 = vunpack.c.h.b16 %v37
    %v62 = vunpack.c.l.b16 %v38
    %v63 = vunpack.c.h.b16 %v38
    %v64 = vunpack.c.l.b16 %v39
    %v65 = vunpack.c.h.b16 %v39
    %v66 = vunpack.c.l.b16 %v40
    %v67 = vunpack.c.h.b16 %v40
    %v68 = vunpack.c.l.b16 %v41
    %v69 = vunpack.c.h.b16 %v41
    %v70 = vunpack.c.l.b16 %v42
    %v71 = vunpack.c.h.b16 %v42
    %v72 = vunpack.c.l.b16 %v43
    %v73 = vunpack.c.h.b16 %v43
    %v74 = vpack.c.b16 %v58, %v54
    %v75 = vpack.c.b16 %v59, %v55
    %v76 = vpack.c.b16 %v60, %v56
    %v77 = vpack.c.b16 %v61, %v57
    %v78 = vpack.c.b16 %v66, %v62
    %v79 = vpack.c.b16 %v67, %v63
    %v80 = vpack.c.b16 %v68, %v64
    %v81 = vpack.c.b16 %v69, %v65
    %v82 = vpack.c.b16 %v70, %v70
    %v83 = vpack.c.b16 %v71, %v71
    %v84 = vpack.c.b16 %v72, %v72
    %v85 = vpack.c.b16 %v73, %v73
    %vm94 = vcmask 293888
    %v96 = vsel %vm94, %v33, 0
    %vm98 = vcmask 1041408
    %v100 = vsel %vm98, %v82, 0
    %v103 = vsel %vm98, %v83, 0
    %v106 = vsel %vm98, %v84, 0
    %v109 = vsel %vm98, %v85, 0
    %111 = vmatprep.subr.bf16.mxu0 %v75
    %112 = vmatpush1.bf16.msra.mxu0 %v74
    %113 = vmatprep.subr.bf16.mxu0 %v79
    %114 = vmatpush1.bf16.msra.mxu0 %v78
    %115 = vmatprep.subr.bf16.mxu0 %v103
    %116 = vmatpush1.bf16.msra.mxu0 %v100
    %117 = vmatprep.subr.bf16.mxu0 0
    %118 = vmatpush1.bf16.msra.mxu0 0
    %119 = vmatprep.subr.bf16.mxu0 0
    %120 = vmatpush1.bf16.msra.mxu0 0
    %121 = vmatprep.subr.bf16.mxu0 0
    %122 = vmatpush1.bf16.msra.mxu0 0
    %123 = vmatprep.subr.bf16.mxu0 0
    %124 = vmatpush1.bf16.msra.mxu0 0
    %125 = vmatprep.subr.bf16.mxu0 0
    %126 = vmatpush1.bf16.msra.mxu0 0
    %127 = vmatprep.subr.bf16.mxu0 0
    %128 = vmatpush1.bf16.msra.mxu0 0
    %129 = vmatprep.subr.bf16.mxu0 0
    %130 = vmatpush1.bf16.msra.mxu0 0
    %131 = vmatprep.subr.bf16.mxu0 0
    %132 = vmatpush1.bf16.msra.mxu0 0
    %133 = vmatprep.subr.bf16.mxu0 0
    %134 = vmatpush1.bf16.msra.mxu0 0
    %135 = vmatprep.subr.bf16.mxu0 0
    %136 = vmatpush1.bf16.msra.mxu0 0
    %137 = vmatprep.subr.bf16.mxu0 0
    %138 = vmatpush1.bf16.msra.mxu0 0
    %139 = vmatprep.subr.bf16.mxu0 0
    %140 = vmatpush1.bf16.msra.mxu0 0
    %141 = vmatprep.subr.bf16.mxu0 0
    %142 = vmatpush1.bf16.msra.mxu0 0
    %143 = vmatprep.mubr.bf16.mxu0 0
    %144 = vmatmul.mubr.bf16.gmra.mrb[0].mxu0 %v96
    %v145 = vpop.f32.mrb[0].mxu0
    %v146 = vadd.f32 0.0, %v145
    %v147 = vpop.f32.mrb[0].mxu0
    %v148 = vadd.f32 0.0, %v147
    %v149 = vpop.f32.mrb[0].mxu0
    %v150 = vpop.f32.mrb[0].mxu0
    %151 = vdwg.mxu0
    %152 = vmatprep.subr.bf16.mxu0 %v77
    %153 = vmatpush1.bf16.msra.mxu0 %v76
    %154 = vmatprep.subr.bf16.mxu0 %v81
    %155 = vmatpush1.bf16.msra.mxu0 %v80
    %156 = vmatprep.subr.bf16.mxu0 %v109
    %157 = vmatpush1.bf16.msra.mxu0 %v106
    %158 = vmatprep.subr.bf16.mxu0 0
    %159 = vmatpush1.bf16.msra.mxu0 0
    %160 = vmatprep.subr.bf16.mxu0 0
    %161 = vmatpush1.bf16.msra.mxu0 0
    %162 = vmatprep.subr.bf16.mxu0 0
    %163 = vmatpush1.bf16.msra.mxu0 0
    %164 = vmatprep.subr.bf16.mxu0 0
    %165 = vmatpush1.bf16.msra.mxu0 0
    %166 = vmatprep.subr.bf16.mxu0 0
    %167 = vmatpush1.bf16.msra.mxu0 0
    %168 = vmatprep.subr.bf16.mxu0 0
    %169 = vmatpush1.bf16.msra.mxu0 0
    %170 = vmatprep.subr.bf16.mxu0 0
    %171 = vmatpush1.bf16.msra.mxu0 0
    %172 = vmatprep.subr.bf16.mxu0 0
    %173 = vmatpush1.bf16.msra.mxu0 0
    %174 = vmatprep.subr.bf16.mxu0 0
    %175 = vmatpush1.bf16.msra.mxu0 0
    %176 = vmatprep.subr.bf16.mxu0 0
    %177 = vmatpush1.bf16.msra.mxu0 0
    %178 = vmatprep.subr.bf16.mxu0 0
    %179 = vmatpush1.bf16.msra.mxu0 0
    %180 = vmatprep.subr.bf16.mxu0 0
    %181 = vmatpush1.bf16.msra.mxu0 0
    %182 = vmatprep.subr.bf16.mxu0 0
    %183 = vmatpush1.bf16.msra.mxu0 0
    %184 = vmatprep.mubr.bf16.mxu0 0
    %185 = vmatmul.mubr.bf16.gmra.mrb[0].mxu0 %v96
    %v186 = vpop.f32.mrb[0].mxu0
    %v187 = vadd.f32 0.0, %v186
    %v188 = vpop.f32.mrb[0].mxu0
    %v189 = vadd.f32 0.0, %v188
    %v190 = vpop.f32.mrb[0].mxu0
    %v191 = vpop.f32.mrb[0].mxu0
    %192 = vdwg.mxu0
    %v193 = vadd.f32 %v146, %v148
    %v194 = vadd.f32 %v193, %v187
    %v195 = vadd.f32 %v194, %v189
    %196 = vadd.xlane.f32.xlu0 %v195
    %v197 = vpop.xlane.xlu0 %196
    %v198 = vrcp.pop 512.0
    %v199 = vmul.f32 %v197, %v198
    %v200 = vsub.f32 %v146, %v199
    %v201 = vsub.f32 %v148, %v199
    %v202 = vsub.f32 %v187, %v199
    %v203 = vsub.f32 %v189, %v199
    %v204 = vmul.f32 %v200, %v200
    %v205 = vmul.f32 %v201, %v201
    %v206 = vmul.f32 %v202, %v202
    %v207 = vmul.f32 %v203, %v203
    %v208 = vadd.f32 %v204, %v205
    %v209 = vadd.f32 %v208, %v206
    %v210 = vadd.f32 %v209, %v207
    %211 = vadd.xlane.f32.xlu0 %v210
    %v212 = vpop.xlane.xlu0 %211
    %v213 = vmul.f32 %v212, %v198
    %v214 = vld [vmem:[%s2] sm:$0xff]
    %v215 = vadd.f32 %v213, 1e-05
    %v216 = vrsqrt.pop %v215
    %v217 = vmul.f32 %v214, %v216
    %219 = vset.pattern.permute.xlu0 0
    %220 = vperm.xlu0 %219, %v217
    %v221 = vpop.permute.xlu0 %220
    %v223 = vmul.f32 %v200, %v221
    %v224 = vmul.f32 %v201, %v221
    %v225 = vmul.f32 %v202, %v221
    %v226 = vmul.f32 %v203, %v221
    %v227 = vld [vmem:[%s3] sm:$0xff]
    %229 = vset.pattern.permute.xlu0 0
    %230 = vperm.xlu0 %229, %v227
    %v231 = vpop.permute.xlu0 %230
    %v233 = vadd.f32 %v223, %v231
    %v234 = vadd.f32 %v224, %v231
    %v235 = vadd.f32 %v225, %v231
    %v236 = vadd.f32 %v226, %v231
    %v237 = vmax.f32 %v233, 0.0
    %v238 = vmax.f32 %v234, 0.0
    %v239 = vmax.f32 %v235, 0.0
    %v240 = vmax.f32 %v236, 0.0
    %241 = vst [vmem:[#allocation5] sm:$0xff] %v237
    %242 = vst [vmem:[#allocation5 + $0x8] sm:$0xff] %v238
    %s243 = scalar_lea.vmem [#allocation5], 16
    %244 = vst [vmem:[%s243] sm:$0xff] %v239
    %245 = vst [vmem:[%s243 + $0x8] sm:$0xff] %v240
    // Predicated region
    $region22: #{tpu_custom_call.1} parent=1 // pred_check
      _
    $region23: #{tpu_custom_call.1} parent=1 // pred_check_branch
      %247 = sbr.rel (0) target = $region25
    $region24: #{tpu_custom_call.1} parent=1 // pred_region
      %s249 = ssub.s32 512, 512
      %250 = vsyncadd [#allocation4], %s249
      %s251 = sshll.u32 [#allocation5], 4
      %s252 = int_to_ptr.vmem [resolvable:$true] %s251
      %257 = dma.vmem_to_hbm [thread:$0]  %s252, 512, %s4, [#allocation4], 256, 256, 16
    $region25: #{tpu_custom_call.1} parent=1 // pred_fallthru
      _
    // Predicated region
    $region26: #{tpu_custom_call.1} parent=1 // pred_check
      _
    $region27: #{tpu_custom_call.1} parent=1 // pred_check_branch
      %259 = sbr.rel (0) target = $region29
    $region28: #{tpu_custom_call.1} parent=1 // pred_region
      %260 = dma.done [#allocation4], 512
    $region29: #{tpu_custom_call.1} parent=1 // pred_fallthru
      _
    %261 = vsyncpa [#allocation3], 1
    %262 = vsyncpa [#allocation4], 1

</llo_original>
